<compile_context>
chip_gen: v6e
topology: v6e:2x2x1
jax: 0.10.0
libtpu: 0.0.40
codegen_flags: <defaults>
</compile_context>

<pallas_src>
import jax
import jax.numpy as jnp
from jax.experimental import pallas as pl
from jax.experimental.pallas import tpu as pltpu


# ---------------------------------------------------------------------------
# Kernels
# ---------------------------------------------------------------------------

def _identity_kernel(x_ref, o_ref):
    # Elementwise identity on the current VMEM tile.
    o_ref[...] = x_ref[...]


def _hbm_copy_kernel(x_hbm, o_hbm, sem):
    # Direct HBM -> HBM DMA: no VMEM crossing, no vld/vst, no grid pipeline.
    cp = pltpu.make_async_copy(x_hbm, o_hbm, sem)
    cp.start()
    cp.wait()


# ---------------------------------------------------------------------------
# Tiling heuristics
# ---------------------------------------------------------------------------

_MAX_LANES = 8192  # cap on the lane-dense reshape width (one row << one block)


def _device_kind():
    try:
        return jax.devices()[0].device_kind.lower()
    except Exception:
        return ""


def _block_bytes_target(kind):
    # Per-block byte budget.  Input + output, each double-buffered => scoped
    # VMEM footprint ~4x this value.
    #   v5e : 16 MiB scoped default -> 2 MiB blocks (8 MiB footprint).
    #   v6e : 32 MiB scoped default -> 2 MiB blocks are already ~85% roofline.
    #   v7x : ~3.2 TB/s HBM makes the fixed ~0.35 us/step overhead 2.3x more
    #         expensive -> 4 MiB blocks (16 MiB footprint, < 32 MiB scoped,
    #         well under the 64 MiB physical VMEM).
    if "v7" in kind:
        return 4 * 1024 * 1024
    return 2 * 1024 * 1024


def _sublane_multiple(dtype):
    # Sub-32-bit dtypes pack along sublanes: minimum row tile is 8 (f32/i32),
    # 16 (bf16/f16), 32 (int8/fp8).
    itemsize = jnp.dtype(dtype).itemsize
    if itemsize >= 4:
        return 8
    return 8 * (4 // itemsize)


def _pick_layout(total):
    """Lane-dense (rows, cols): cols is a large multiple of 128 (<= _MAX_LANES)."""
    cols = 128
    while cols * 2 <= _MAX_LANES and cols * 2 <= total:
        cols *= 2
    rows = -(-total // cols)
    return rows, cols


# ---------------------------------------------------------------------------
# Forward
# ---------------------------------------------------------------------------

def dequant_stub_forward(x, *, use_pallas="auto", copy_mode="vmem", donate=False):
    """DeQuantStub.forward before convert: identity (y = x).

    use_pallas:
      False  -> return x directly (zero-cost identity; the production path).
      "auto" -> Pallas only for tensors of at least ~one block; otherwise x.
      True   -> always run the Pallas copy (used for testing / forced copy).
    copy_mode:
      "vmem" -> tiled lane-dense VMEM passthrough (pipelined blocks).
      "dma"  -> single direct HBM->HBM DMA (no VMEM usage at all).
    donate:
      alias input buffer to the output (only if the caller no longer needs x).
    """
    if x.ndim == 0 or x.size == 0 or use_pallas is False:
        return x  # zero-cost identity: nothing to move

    kind = _device_kind()
    block_bytes = _block_bytes_target(kind)
    itemsize = jnp.dtype(x.dtype).itemsize

    if use_pallas == "auto" and x.size * itemsize < block_bytes:
        # Sub-block tensors never amortize launch + pipeline prologue; the
        # identity fast path is strictly better.
        return x

    # Pure bandwidth op: read + write every byte once.
    cost = pl.CostEstimate(
        flops=0, transcendentals=0, bytes_accessed=2 * x.size * itemsize)

    if copy_mode == "dma":
        # No-VMEM variant: one HBM->HBM DMA over the untouched array.
        return pl.pallas_call(
            _hbm_copy_kernel,
            out_shape=jax.ShapeDtypeStruct(x.shape, x.dtype),
            in_specs=[pl.BlockSpec(memory_space=pl.ANY)],
            out_specs=pl.BlockSpec(memory_space=pl.ANY),
            scratch_shapes=[pltpu.SemaphoreType.DMA(())],
            cost_estimate=cost,
            input_output_aliases=({0: 0} if donate else {}),
        )(x)

    # ---- tiled lane-dense VMEM passthrough --------------------------------
    orig_shape = x.shape
    dtype = x.dtype
    total = x.size
    sub = _sublane_multiple(dtype)

    rows, cols = _pick_layout(total)
    padded = rows * cols
    x_flat = x.reshape(-1)
    if padded != total:
        # Pad to a multiple of the lane width so every vld/vst is an unmasked
        # full-128-lane access; slice back after the kernel.  One cheap XLA op.
        x_flat = jnp.pad(x_flat, (0, padded - total))
    x2 = x_flat.reshape(rows, cols)

    # Row tiling sized by bytes, rounded to the dtype-aware sublane multiple.
    row_bytes = cols * itemsize
    tile_r = max(sub, (block_bytes // row_bytes // sub) * sub)
    if tile_r >= rows:
        tile_r = rows  # full extent is always a legal block dim
        # v7x megacore: keep >=2 row blocks so both TensorCores get work.
        if "v7" in kind and rows >= 2 * sub:
            tile_r = max(sub, (((rows + 1) // 2) // sub) * sub)

    grid = (pl.cdiv(rows, tile_r),)

    out2 = pl.pallas_call(
        _identity_kernel,
        out_shape=jax.ShapeDtypeStruct((rows, cols), dtype),
        grid=grid,
        in_specs=[pl.BlockSpec((tile_r, cols), lambda i: (i, 0))],
        out_specs=pl.BlockSpec((tile_r, cols), lambda i: (i, 0)),
        compiler_params=pltpu.CompilerParams(
            # Independent row blocks: shards across the 2 TCs on v7x; no-op
            # (but harmless) on single-TC v5e/v6e.
            dimension_semantics=("parallel",),
        ),
        cost_estimate=cost,
        input_output_aliases=({0: 0} if donate else {}),
    )(x2)

    out_flat = out2.reshape(-1)
    if padded != total:
        out_flat = out_flat[:total]
    return out_flat.reshape(orig_shape)


if __name__ == "__main__":
    key = jax.random.PRNGKey(0)
    k0, k1, k2 = jax.random.split(key, 3)

    # NCHW f32 example (lane-dense layout: 2*4*16*16 = 2048 elements).
    x = jax.random.normal(k0, (2, 4, 16, 16), dtype=jnp.float32)
    y = jax.block_until_ready(dequant_stub_forward(x, use_pallas=True))
    assert y.shape == x.shape and y.dtype == x.dtype
    assert bool(jnp.all(y == x))

    # Odd shape — exercises the pad-to-128 + slice-back path (no masked lanes).
    x_odd = jax.random.normal(k1, (3, 5, 7), dtype=jnp.float32)
    y_odd = jax.block_until_ready(dequant_stub_forward(x_odd, use_pallas=True))
    assert y_odd.shape == x_odd.shape
    assert bool(jnp.all(y_odd == x_odd))

    # bf16 — dtype-aware sublane rounding (packed dtype).
    x_bf = jax.random.normal(k2, (2, 8, 16, 16), dtype=jnp.bfloat16)
    y_bf = jax.block_until_ready(dequant_stub_forward(x_bf, use_pallas=True))
    assert y_bf.dtype == x_bf.dtype
    assert bool(jnp.all(y_bf == x_bf))

    # int8 — typical quant-flow dtype, odd size, padding path.
    x_i8 = jax.random.randint(jax.random.PRNGKey(3), (4, 3, 9), -128, 127,
                              dtype=jnp.int8)
    y_i8 = jax.block_until_ready(dequant_stub_forward(x_i8, use_pallas=True))
    assert bool(jnp.all(y_i8 == x_i8))

    # No-VMEM variant: direct HBM->HBM DMA copy.
    y_dma = jax.block_until_ready(
        dequant_stub_forward(x, use_pallas=True, copy_mode="dma"))
    assert bool(jnp.all(y_dma == x))

    # "auto": sub-block tensors take the zero-cost identity fast path
    # (the recommended production path for an identity).
    y_auto = dequant_stub_forward(x, use_pallas="auto")
    assert y_auto is x

    print("KERNEL_OK")
</pallas_src>

<mosaic_0001>
module attributes {stable_mosaic.version = 11 : i64} {
  func.func @_identity_kernel(%arg0: i32, %arg1: memref<1x2048xf32, #tpu.memory_space<vmem>>, %arg2: memref<1x2048xf32, #tpu.memory_space<vmem>>) attributes {dimension_semantics = [#tpu.dimension_semantics<parallel>], iteration_bounds = array<i64: 1>, scalar_prefetch = 0 : i64, scratch_operands = 0 : i64, tpu.core_type = #tpu.core_type<tc>, window_params = [{transform_indices = @transform_0, window_bounds = array<i64: 1, 2048>}, {transform_indices = @transform_1, window_bounds = array<i64: 1, 2048>}]} {
    %c0 = arith.constant 0 : index
    %c0_0 = arith.constant 0 : index
    %0 = vector.load %arg1[%c0, %c0_0] : memref<1x2048xf32, #tpu.memory_space<vmem>>, vector<1x2048xf32>
    %c0_1 = arith.constant 0 : index
    %c0_2 = arith.constant 0 : index
    %1 = vector.load %arg2[%c0_1, %c0_2] : memref<1x2048xf32, #tpu.memory_space<vmem>>, vector<1x2048xf32>
    tpu.vector_store %arg2[%c0_1, %c0_2], %0 {strides = array<i32>} : memref<1x2048xf32, #tpu.memory_space<vmem>>, vector<1x2048xf32>,
    return
  }
  func.func @transform_0(%arg0: i32) -> (i32, i32) {
    %c0_i32 = arith.constant 0 : i32
    %c0_i32_0 = arith.constant 0 : i32
    return %arg0, %c0_i32 : i32, i32
  }
  func.func @transform_1(%arg0: i32) -> (i32, i32) {
    %c0_i32 = arith.constant 0 : i32
    %c0_i32_0 = arith.constant 0 : i32
    return %arg0, %c0_i32 : i32, i32
  }
}

</mosaic_0001>

<llo_original>
// kernel: tpu_custom_call.1
$region0: #{tpu_custom_call.1}
  #allocation0 [shape = 'u32[]', space=smem, size = 0x4, offset = 0x4, fixed_abs, tag = 'smem constant byte address 0x4 - core index']
  #allocation1 [shape = 'u32[144,128]{1,0:T(1,128)}', space=vmem, size = 0x12000, scoped, tag = 'internal scratch']
  %s0 = inlined_call_operand.hbm [shape: f32[1,2048], index: 0, kind: input, shape index: {}]
  %s1 = inlined_call_operand.hbm [shape: f32[1,2048], index: 1, kind: output, shape index: {}]
  %s2 = sld [smem:[#allocation0]]
  $region18: #{tpu_custom_call.1} parent=0
    _
  %s4 = ssub.s32 1, %s2
  %s5 = scalar_select 0, %s4, %s2
  $region1: #{tpu_custom_call.1} parent=0
    #allocation2 [shape = 'u8[8192]{0}', space=vmem, size = 0x2000, scoped, tag = 'input window, operand 0, single buffered']
    #allocation3 [shape = 's32[1]{0}', space=sflag, size = 0x4, scoped, tag = 'scoped memory for tpu_custom_call.1']
    #allocation4 [shape = 's32[1]{0}', space=sflag, size = 0x4, scoped, tag = 'scoped memory for tpu_custom_call.1']
    #allocation5 [shape = 'u8[8192]{0}', space=vmem, size = 0x2000, scoped, tag = 'output window, operand 0, single buffered']
    %6 = vsyncpa [#allocation3], 0
    %7 = vsyncpa [#allocation4], 0
    // Predicated region
    $region2: #{tpu_custom_call.1} parent=1 // pred_check
      _
    $region3: #{tpu_custom_call.1} parent=1 // pred_check_branch
      %9 = sbr.rel (0) target = $region5
    $region4: #{tpu_custom_call.1} parent=1 // pred_region
      %s11 = ssub.s32 256, 256
      %12 = vsyncadd [#allocation3], %s11
      %s14 = sshll.u32 [#allocation2], 4
      %s15 = int_to_ptr.vmem [resolvable:$true] %s14
      %17 = dma.hbm_to_vmem [thread:$0]  %s0, 256, %s15, [#allocation3]
    $region5: #{tpu_custom_call.1} parent=1 // pred_fallthru
      _
    // Predicated region
    $region6: #{tpu_custom_call.1} parent=1 // pred_check
      _
    $region7: #{tpu_custom_call.1} parent=1 // pred_check_branch
      %19 = sbr.rel (0) target = $region9
    $region8: #{tpu_custom_call.1} parent=1 // pred_region
      %20 = dma.done [#allocation3], 256
    $region9: #{tpu_custom_call.1} parent=1 // pred_fallthru
      _
    %v21 = vld [vmem:[#allocation2] sm:$0xff]
    %v22 = vld [vmem:[#allocation2 + $0x8] sm:$0xff]
    %23 = vst [vmem:[#allocation5] sm:$0xff] %v21
    %24 = vst [vmem:[#allocation5 + $0x8] sm:$0xff] %v22
    // Predicated region
    $region10: #{tpu_custom_call.1} parent=1 // pred_check
      _
    $region11: #{tpu_custom_call.1} parent=1 // pred_check_branch
      %26 = sbr.rel (0) target = $region13
    $region12: #{tpu_custom_call.1} parent=1 // pred_region
      %s28 = ssub.s32 256, 256
      %29 = vsyncadd [#allocation4], %s28
      %s31 = sshll.u32 [#allocation5], 4
      %s32 = int_to_ptr.vmem [resolvable:$true] %s31
      %34 = dma.vmem_to_hbm [thread:$0]  %s32, 256, %s1, [#allocation4]
    $region13: #{tpu_custom_call.1} parent=1 // pred_fallthru
      _
    // Predicated region
    $region14: #{tpu_custom_call.1} parent=1 // pred_check
      _
    $region15: #{tpu_custom_call.1} parent=1 // pred_check_branch
      %36 = sbr.rel (0) target = $region17
    $region16: #{tpu_custom_call.1} parent=1 // pred_region
      %37 = dma.done [#allocation4], 256
    $region17: #{tpu_custom_call.1} parent=1 // pred_fallthru
      _
    %38 = vsyncpa [#allocation3], 1
    %39 = vsyncpa [#allocation4], 1

</llo_original>
